<compile_context>
chip_gen: v7x
topology: tpu7x:2x2x1
jax: 0.10.0
libtpu: 0.0.40
codegen_flags: <defaults>
</compile_context>

<pallas_src>
import functools

import jax
import jax.numpy as jnp
import numpy as np
from jax.experimental import pallas as pl
from jax.experimental.pallas import tpu as pltpu


def _focal_loss_kernel(x_ref, t_ref, out_ref, acc_ref, *,
                       gamma, num_classes, alpha_vals, sub_rows, n_sub,
                       need_mask):
    j = pl.program_id(1)

    @pl.when(j == 0)
    def _():
        acc_ref[...] = jnp.zeros_like(acc_ref)

    C = num_classes
    SUB = sub_rows

    def chunk_loss(r0):
        """Per-pixel focal loss for rows [r0, r0 + SUB) of this tile."""
        t = t_ref[0, 0, pl.ds(r0, SUB), :]                       # (SUB,128) int32

        # Pass 1: running max over the class axis (O(1) live state).
        m = x_ref[0, 0, pl.ds(r0, SUB), :].astype(jnp.float32)
        for c in range(1, C):
            m = jnp.maximum(m, x_ref[0, c, pl.ds(r0, SUB), :].astype(jnp.float32))

        # Pass 2: streaming logsumexp + one-hot gathers sharing one select.
        sum_e = jnp.zeros_like(m)
        z_t = jnp.zeros_like(m)
        e_t = jnp.zeros_like(m)
        a_t = jnp.zeros_like(m) if alpha_vals is not None else None
        for c in range(C):
            z_c = x_ref[0, c, pl.ds(r0, SUB), :].astype(jnp.float32) - m
            e_c = jnp.exp(z_c)
            sum_e = sum_e + e_c
            sel = t == c
            z_t = jnp.where(sel, z_c, z_t)
            e_t = jnp.where(sel, e_c, e_t)
            if alpha_vals is not None:
                a_t = jnp.where(sel, jnp.float32(alpha_vals[c]), a_t)

        logpt = z_t - jnp.log(sum_e)                    # log p_t
        # p_t = e_t / sum_e via approx EUP reciprocal + one Newton refinement.
        r = pl.reciprocal(sum_e, approx=True)
        r = r * (2.0 - sum_e * r)
        pt = e_t * r

        if alpha_vals is not None:
            logpt = logpt * a_t

        one_minus_pt = jnp.maximum(1.0 - pt, 0.0)       # benign clamp vs rounding
        g = float(gamma)
        if g == 0.0:
            loss = -logpt
        elif g == int(g) and g > 0:
            focal = one_minus_pt                        # integral gamma: VPU muls
            for _ in range(int(g) - 1):
                focal = focal * one_minus_pt
            loss = -(focal * logpt)
        else:
            loss = -(one_minus_pt ** g) * logpt         # general float gamma

        if need_mask:
            loss = jnp.where(t >= 0, loss, 0.0)         # padded pixels -> 0
        return loss

    def body(i, acc):
        r0 = pl.multiple_of(i * SUB, SUB)
        return acc + chunk_loss(r0)

    acc_ref[...] += jax.lax.fori_loop(
        0, n_sub, body, jnp.zeros((SUB, 128), jnp.float32), unroll=True)

    @pl.when(j == pl.num_programs(1) - 1)
    def _():
        # Sublane-only reduce; lane-dense (1,1,128) partial per image.  The
        # tiny cross-image sum + mean happen in the wrapper.
        out_ref[...] = jnp.sum(acc_ref[...], axis=0, keepdims=True).reshape(1, 1, 128)


def _round_up(x, m):
    return (x + m - 1) // m * m


def focal_loss(logits_nchw, target_nhw, *, gamma=0.0, alpha=None,
               size_average=True, max_tile_rows=256, sub_rows=8):
    """Forward pass matching FocalLoss(gamma, alpha, size_average)."""
    N, C, H, W = logits_nchw.shape
    HW = H * W
    rows = -(-HW // 128)                                 # cdiv(HW, 128)

    rows8 = _round_up(max(rows, 1), sub_rows)
    tile_rows = rows8 if rows8 <= max_tile_rows else max_tile_rows
    rows_pad = _round_up(rows8, tile_rows)
    HW_pad = rows_pad * 128
    need_mask = HW_pad != HW

    # Native layout, free reshapes; pad (target = -1 => masked) only if needed.
    x = logits_nchw.reshape(N, C, HW)
    t = target_nhw.reshape(N, 1, HW).astype(jnp.int32)
    # TODO(synk): accept int8/int16 targets end-to-end to shave HBM traffic on
    # memory-bound v5e/v6e (kernel compare is dtype-agnostic after the upcast).
    if need_mask:
        x = jnp.pad(x, ((0, 0), (0, 0), (0, HW_pad - HW)))
        t = jnp.pad(t, ((0, 0), (0, 0), (0, HW_pad - HW)), constant_values=-1)
    x = x.reshape(N, C, rows_pad, 128)
    t = t.reshape(N, 1, rows_pad, 128)

    # Static alpha handling, mirroring the PyTorch module __init__.
    # Scalar alpha builds [alpha, 1-alpha] and is only valid for C == 2
    # (inherited from the original module); the assert enforces it.
    if isinstance(alpha, (float, int)) and not isinstance(alpha, bool):
        alpha_vals = (float(alpha), 1.0 - float(alpha))
    elif isinstance(alpha, (list, tuple)):
        alpha_vals = tuple(float(a) for a in alpha)
    elif alpha is None:
        alpha_vals = None
    else:
        alpha_vals = tuple(float(a) for a in np.asarray(alpha).reshape(-1))
    if alpha_vals is not None:
        assert len(alpha_vals) == C, "alpha must have one entry per class"

    kernel = functools.partial(
        _focal_loss_kernel,
        gamma=float(gamma),
        num_classes=C,
        alpha_vals=alpha_vals,
        sub_rows=sub_rows,
        n_sub=tile_rows // sub_rows,
        need_mask=need_mask,
    )

    partials = pl.pallas_call(
        kernel,
        out_shape=jax.ShapeDtypeStruct((N, 1, 128), jnp.float32),
        grid_spec=pltpu.PrefetchScalarGridSpec(
            num_scalar_prefetch=0,
            grid=(N, rows_pad // tile_rows),
            in_specs=[
                # logits: per-class (tile_rows, 128) sublane/lane-dense slabs
                pl.BlockSpec((1, C, tile_rows, 128), lambda n, j: (n, 0, j, 0)),
                # targets: (tile_rows, 128) int32 slab
                pl.BlockSpec((1, 1, tile_rows, 128), lambda n, j: (n, 0, j, 0)),
            ],
            out_specs=pl.BlockSpec((1, 1, 128), lambda n, j: (n, 0, 0)),
            scratch_shapes=[pltpu.VMEM((sub_rows, 128), jnp.float32)],
        ),
        compiler_params=pltpu.CompilerParams(
            # batch axis parallel (2nd TensorCore on v7x); the row sweep is the
            # serial reduction axis.
            dimension_semantics=("parallel", "arbitrary"),
            vmem_limit_bytes=32 * 1024 * 1024,
        ),
    )(x, t)
    # TODO(synk): on v7x with N == 1, add a second "parallel" shard over the
    # row sweep so both TensorCores are used.

    total = jnp.sum(partials)
    if size_average:
        total = total / jnp.float32(N * HW)
    return total


def _focal_loss_ref(logits_nchw, target_nhw, *, gamma, alpha, size_average):
    N, C, H, W = logits_nchw.shape
    x = jnp.transpose(logits_nchw.reshape(N, C, H * W), (0, 2, 1)).reshape(-1, C)
    t = target_nhw.reshape(-1).astype(jnp.int32)
    logp = jax.nn.log_softmax(x, axis=1)
    logpt = jnp.take_along_axis(logp, t[:, None], axis=1)[:, 0]
    pt = jnp.exp(logpt)
    if alpha is not None:
        a = jnp.asarray(alpha, dtype=x.dtype)
        logpt = logpt * a[t]
    loss = -1.0 * (1.0 - pt) ** gamma * logpt
    return loss.mean() if size_average else loss.sum()


if __name__ == "__main__":
    key = jax.random.PRNGKey(0)
    k1, k2 = jax.random.split(key)

    N, C, H, W = 2, 4, 16, 16          # H*W = 256 pixels per image
    gamma = 2.0
    alpha = [0.25, 0.75, 0.5, 0.5]     # per-class alpha (len == C)
    size_average = True

    logits = jax.random.normal(k1, (N, C, H, W), dtype=jnp.float32)
    target = jax.random.randint(k2, (N, H, W), 0, C, dtype=jnp.int32)

    out = focal_loss(logits, target, gamma=gamma, alpha=alpha,
                     size_average=size_average)
    out = jax.block_until_ready(out)

    ref = _focal_loss_ref(logits, target, gamma=gamma, alpha=alpha,
                          size_average=size_average)
    np.testing.assert_allclose(np.asarray(out), np.asarray(ref),
                               rtol=1e-5, atol=1e-5)
    print("KERNEL_OK")
</pallas_src>

<mosaic_0001>
module attributes {stable_mosaic.version = 11 : i64} {
  func.func @_focal_loss_kernel(%arg0: i32, %arg1: i32, %arg2: memref<1x4x8x128xf32, #tpu.memory_space<vmem>>, %arg3: memref<1x1x8x128xi32, #tpu.memory_space<vmem>>, %arg4: memref<1x1x128xf32, #tpu.memory_space<vmem>>, %arg5: memref<8x128xf32, #tpu.memory_space<vmem>>) attributes {dimension_semantics = [#tpu.dimension_semantics<parallel>, #tpu.dimension_semantics<arbitrary>], iteration_bounds = array<i64: 2, 1>, scalar_prefetch = 0 : i64, scratch_operands = 1 : i64, tpu.core_type = #tpu.core_type<tc>, window_params = [{transform_indices = @transform_0, window_bounds = array<i64: 1, 4, 8, 128>}, {transform_indices = @transform_1, window_bounds = array<i64: 1, 1, 8, 128>}, {transform_indices = @transform_2, window_bounds = array<i64: 1, 1, 128>}]} {
    %c0_i32 = arith.constant 0 : i32
    %0 = arith.cmpi eq, %arg1, %c0_i32 : i32
    %1 = arith.extui %0 : i1 to i32
    %c0_i32_0 = arith.constant 0 : i32
    %2 = arith.cmpi ne, %1, %c0_i32_0 : i32
    scf.if %2 {
      %cst_47 = arith.constant 0.000000e+00 : f32
      %104 = vector.broadcast %cst_47 : f32 to vector<8x128xf32>
      %c0_48 = arith.constant 0 : index
      %c0_49 = arith.constant 0 : index
      %105 = vector.load %arg5[%c0_48, %c0_49] : memref<8x128xf32, #tpu.memory_space<vmem>>, vector<8x128xf32>
      tpu.vector_store %arg5[%c0_48, %c0_49], %104 {strides = array<i32>} : memref<8x128xf32, #tpu.memory_space<vmem>>, vector<8x128xf32>,
    } else {
    }
    %c0 = arith.constant 0 : index
    %c0_1 = arith.constant 0 : index
    %3 = vector.load %arg5[%c0, %c0_1] : memref<8x128xf32, #tpu.memory_space<vmem>>, vector<8x128xf32>
    %cst = arith.constant 0.000000e+00 : f32
    %4 = vector.broadcast %cst : f32 to vector<8x128xf32>
    %c0_i32_2 = arith.constant 0 : i32
    %c8_i32 = arith.constant 8 : i32
    %5 = arith.muli %c0_i32_2, %c8_i32 : i32
    %6 = tpu.assume_multiple %5, 8 : i32
    %c0_3 = arith.constant 0 : index
    %c0_4 = arith.constant 0 : index
    %7 = arith.index_cast %6 : i32 to index
    %c0_5 = arith.constant 0 : index
    %8 = vector.load %arg3[%c0_3, %c0_4, %7, %c0_5] : memref<1x1x8x128xi32, #tpu.memory_space<vmem>>, vector<1x1x8x128xi32>
    %9 = vector.shape_cast %8 : vector<1x1x8x128xi32> to vector<8x128xi32>
    %c0_6 = arith.constant 0 : index
    %c0_7 = arith.constant 0 : index
    %10 = arith.index_cast %6 : i32 to index
    %c0_8 = arith.constant 0 : index
    %11 = vector.load %arg2[%c0_6, %c0_7, %10, %c0_8] : memref<1x4x8x128xf32, #tpu.memory_space<vmem>>, vector<1x1x8x128xf32>
    %12 = vector.shape_cast %11 : vector<1x1x8x128xf32> to vector<8x128xf32>
    %c0_9 = arith.constant 0 : index
    %c1 = arith.constant 1 : index
    %13 = arith.index_cast %6 : i32 to index
    %c0_10 = arith.constant 0 : index
    %14 = vector.load %arg2[%c0_9, %c1, %13, %c0_10] : memref<1x4x8x128xf32, #tpu.memory_space<vmem>>, vector<1x1x8x128xf32>
    %15 = vector.shape_cast %14 : vector<1x1x8x128xf32> to vector<8x128xf32>
    %16 = arith.maximumf %12, %15 : vector<8x128xf32>
    %c0_11 = arith.constant 0 : index
    %c2 = arith.constant 2 : index
    %17 = arith.index_cast %6 : i32 to index
    %c0_12 = arith.constant 0 : index
    %18 = vector.load %arg2[%c0_11, %c2, %17, %c0_12] : memref<1x4x8x128xf32, #tpu.memory_space<vmem>>, vector<1x1x8x128xf32>
    %19 = vector.shape_cast %18 : vector<1x1x8x128xf32> to vector<8x128xf32>
    %20 = arith.maximumf %16, %19 : vector<8x128xf32>
    %c0_13 = arith.constant 0 : index
    %c3 = arith.constant 3 : index
    %21 = arith.index_cast %6 : i32 to index
    %c0_14 = arith.constant 0 : index
    %22 = vector.load %arg2[%c0_13, %c3, %21, %c0_14] : memref<1x4x8x128xf32, #tpu.memory_space<vmem>>, vector<1x1x8x128xf32>
    %23 = vector.shape_cast %22 : vector<1x1x8x128xf32> to vector<8x128xf32>
    %24 = arith.maximumf %20, %23 : vector<8x128xf32>
    %cst_15 = arith.constant 0.000000e+00 : f32
    %25 = vector.broadcast %cst_15 : f32 to vector<8x128xf32>
    %cst_16 = arith.constant 0.000000e+00 : f32
    %26 = vector.broadcast %cst_16 : f32 to vector<8x128xf32>
    %cst_17 = arith.constant 0.000000e+00 : f32
    %27 = vector.broadcast %cst_17 : f32 to vector<8x128xf32>
    %cst_18 = arith.constant 0.000000e+00 : f32
    %28 = vector.broadcast %cst_18 : f32 to vector<8x128xf32>
    %c0_19 = arith.constant 0 : index
    %c0_20 = arith.constant 0 : index
    %29 = arith.index_cast %6 : i32 to index
    %c0_21 = arith.constant 0 : index
    %30 = vector.load %arg2[%c0_19, %c0_20, %29, %c0_21] : memref<1x4x8x128xf32, #tpu.memory_space<vmem>>, vector<1x1x8x128xf32>
    %31 = vector.shape_cast %30 : vector<1x1x8x128xf32> to vector<8x128xf32>
    %32 = arith.subf %31, %24 : vector<8x128xf32>
    %33 = math.exp %32 : vector<8x128xf32>
    %34 = arith.addf %25, %33 : vector<8x128xf32>
    %c0_i32_22 = arith.constant 0 : i32
    %35 = vector.broadcast %c0_i32_22 : i32 to vector<8x128xi32>
    %36 = arith.cmpi eq, %9, %35 : vector<8x128xi32>
    %37 = arith.select %36, %32, %26 : vector<8x128xi1>, vector<8x128xf32>
    %38 = arith.select %36, %33, %27 : vector<8x128xi1>, vector<8x128xf32>
    %cst_23 = arith.constant 2.500000e-01 : f32
    %39 = vector.broadcast %cst_23 : f32 to vector<8x128xf32>
    %40 = arith.select %36, %39, %28 : vector<8x128xi1>, vector<8x128xf32>
    %c0_24 = arith.constant 0 : index
    %c1_25 = arith.constant 1 : index
    %41 = arith.index_cast %6 : i32 to index
    %c0_26 = arith.constant 0 : index
    %42 = vector.load %arg2[%c0_24, %c1_25, %41, %c0_26] : memref<1x4x8x128xf32, #tpu.memory_space<vmem>>, vector<1x1x8x128xf32>
    %43 = vector.shape_cast %42 : vector<1x1x8x128xf32> to vector<8x128xf32>
    %44 = arith.subf %43, %24 : vector<8x128xf32>
    %45 = math.exp %44 : vector<8x128xf32>
    %46 = arith.addf %34, %45 : vector<8x128xf32>
    %c1_i32 = arith.constant 1 : i32
    %47 = vector.broadcast %c1_i32 : i32 to vector<8x128xi32>
    %48 = arith.cmpi eq, %9, %47 : vector<8x128xi32>
    %49 = arith.select %48, %44, %37 : vector<8x128xi1>, vector<8x128xf32>
    %50 = arith.select %48, %45, %38 : vector<8x128xi1>, vector<8x128xf32>
    %cst_27 = arith.constant 7.500000e-01 : f32
    %51 = vector.broadcast %cst_27 : f32 to vector<8x128xf32>
    %52 = arith.select %48, %51, %40 : vector<8x128xi1>, vector<8x128xf32>
    %c0_28 = arith.constant 0 : index
    %c2_29 = arith.constant 2 : index
    %53 = arith.index_cast %6 : i32 to index
    %c0_30 = arith.constant 0 : index
    %54 = vector.load %arg2[%c0_28, %c2_29, %53, %c0_30] : memref<1x4x8x128xf32, #tpu.memory_space<vmem>>, vector<1x1x8x128xf32>
    %55 = vector.shape_cast %54 : vector<1x1x8x128xf32> to vector<8x128xf32>
    %56 = arith.subf %55, %24 : vector<8x128xf32>
    %57 = math.exp %56 : vector<8x128xf32>
    %58 = arith.addf %46, %57 : vector<8x128xf32>
    %c2_i32 = arith.constant 2 : i32
    %59 = vector.broadcast %c2_i32 : i32 to vector<8x128xi32>
    %60 = arith.cmpi eq, %9, %59 : vector<8x128xi32>
    %61 = arith.select %60, %56, %49 : vector<8x128xi1>, vector<8x128xf32>
    %62 = arith.select %60, %57, %50 : vector<8x128xi1>, vector<8x128xf32>
    %cst_31 = arith.constant 5.000000e-01 : f32
    %63 = vector.broadcast %cst_31 : f32 to vector<8x128xf32>
    %64 = arith.select %60, %63, %52 : vector<8x128xi1>, vector<8x128xf32>
    %c0_32 = arith.constant 0 : index
    %c3_33 = arith.constant 3 : index
    %65 = arith.index_cast %6 : i32 to index
    %c0_34 = arith.constant 0 : index
    %66 = vector.load %arg2[%c0_32, %c3_33, %65, %c0_34] : memref<1x4x8x128xf32, #tpu.memory_space<vmem>>, vector<1x1x8x128xf32>
    %67 = vector.shape_cast %66 : vector<1x1x8x128xf32> to vector<8x128xf32>
    %68 = arith.subf %67, %24 : vector<8x128xf32>
    %69 = math.exp %68 : vector<8x128xf32>
    %70 = arith.addf %58, %69 : vector<8x128xf32>
    %c3_i32 = arith.constant 3 : i32
    %71 = vector.broadcast %c3_i32 : i32 to vector<8x128xi32>
    %72 = arith.cmpi eq, %9, %71 : vector<8x128xi32>
    %73 = arith.select %72, %68, %61 : vector<8x128xi1>, vector<8x128xf32>
    %74 = arith.select %72, %69, %62 : vector<8x128xi1>, vector<8x128xf32>
    %cst_35 = arith.constant 5.000000e-01 : f32
    %75 = vector.broadcast %cst_35 : f32 to vector<8x128xf32>
    %76 = arith.select %72, %75, %64 : vector<8x128xi1>, vector<8x128xf32>
    %77 = math.log %70 : vector<8x128xf32>
    %78 = arith.subf %73, %77 : vector<8x128xf32>
    %79 = tpu.reciprocal %70 {approx = true} : vector<8x128xf32> -> vector<8x128xf32>
    %80 = arith.mulf %70, %79 : vector<8x128xf32>
    %cst_36 = arith.constant 2.000000e+00 : f32
    %81 = vector.broadcast %cst_36 : f32 to vector<8x128xf32>
    %82 = arith.subf %81, %80 : vector<8x128xf32>
    %83 = arith.mulf %79, %82 : vector<8x128xf32>
    %84 = arith.mulf %74, %83 : vector<8x128xf32>
    %85 = arith.mulf %78, %76 : vector<8x128xf32>
    %cst_37 = arith.constant 1.000000e+00 : f32
    %86 = vector.broadcast %cst_37 : f32 to vector<8x128xf32>
    %87 = arith.subf %86, %84 : vector<8x128xf32>
    %cst_38 = arith.constant 0.000000e+00 : f32
    %88 = vector.broadcast %cst_38 : f32 to vector<8x128xf32>
    %89 = arith.maximumf %87, %88 : vector<8x128xf32>
    %90 = arith.mulf %89, %89 : vector<8x128xf32>
    %91 = arith.mulf %90, %85 : vector<8x128xf32>
    %cst_39 = arith.constant 0.000000e+00 : f32
    %92 = vector.broadcast %cst_39 : f32 to vector<8x128xf32>
    %93 = arith.subf %92, %91 : vector<8x128xf32>
    %c0_i32_40 = arith.constant 0 : i32
    %94 = vector.broadcast %c0_i32_40 : i32 to vector<8x128xi32>
    %95 = arith.cmpi sge, %9, %94 : vector<8x128xi32>
    %cst_41 = arith.constant 0.000000e+00 : f32
    %96 = vector.broadcast %cst_41 : f32 to vector<8x128xf32>
    %97 = arith.select %95, %93, %96 : vector<8x128xi1>, vector<8x128xf32>
    %98 = arith.addf %4, %97 : vector<8x128xf32>
    %c1_i32_42 = arith.constant 1 : i32
    %99 = arith.addf %3, %98 : vector<8x128xf32>
    %c0_43 = arith.constant 0 : index
    %c0_44 = arith.constant 0 : index
    %100 = vector.load %arg5[%c0_43, %c0_44] : memref<8x128xf32, #tpu.memory_space<vmem>>, vector<8x128xf32>
    tpu.vector_store %arg5[%c0_43, %c0_44], %99 {strides = array<i32>} : memref<8x128xf32, #tpu.memory_space<vmem>>, vector<8x128xf32>,
    %c0_i32_45 = arith.constant 0 : i32
    %101 = arith.cmpi eq, %arg1, %c0_i32_45 : i32
    %102 = arith.extui %101 : i1 to i32
    %c0_i32_46 = arith.constant 0 : i32
    %103 = arith.cmpi ne, %102, %c0_i32_46 : i32
    scf.if %103 {
      %c0_47 = arith.constant 0 : index
      %c0_48 = arith.constant 0 : index
      %104 = vector.load %arg5[%c0_47, %c0_48] : memref<8x128xf32, #tpu.memory_space<vmem>>, vector<8x128xf32>
      %cst_49 = arith.constant dense<0.000000e+00> : vector<128xf32>
      %105 = vector.multi_reduction <add>, %104, %cst_49 [0] : vector<8x128xf32> to vector<128xf32>
      %106 = vector.shape_cast %105 : vector<128xf32> to vector<1x128xf32>
      %107 = vector.shape_cast %106 : vector<1x128xf32> to vector<1x1x128xf32>
      %c0_50 = arith.constant 0 : index
      %c0_51 = arith.constant 0 : index
      %c0_52 = arith.constant 0 : index
      %108 = vector.load %arg4[%c0_50, %c0_51, %c0_52] : memref<1x1x128xf32, #tpu.memory_space<vmem>>, vector<1x1x128xf32>
      tpu.vector_store %arg4[%c0_50, %c0_51, %c0_52], %107 {strides = array<i32>} : memref<1x1x128xf32, #tpu.memory_space<vmem>>, vector<1x1x128xf32>,
    } else {
    }
    return
  }
  func.func @transform_0(%arg0: i32, %arg1: i32) -> (i32, i32, i32, i32) {
    %c0_i32 = arith.constant 0 : i32
    %c0_i32_0 = arith.constant 0 : i32
    %c0_i32_1 = arith.constant 0 : i32
    return %arg0, %c0_i32, %arg1, %c0_i32_0 : i32, i32, i32, i32
  }
  func.func @transform_1(%arg0: i32, %arg1: i32) -> (i32, i32, i32, i32) {
    %c0_i32 = arith.constant 0 : i32
    %c0_i32_0 = arith.constant 0 : i32
    %c0_i32_1 = arith.constant 0 : i32
    return %arg0, %c0_i32, %arg1, %c0_i32_0 : i32, i32, i32, i32
  }
  func.func @transform_2(%arg0: i32, %arg1: i32) -> (i32, i32, i32) {
    %c0_i32 = arith.constant 0 : i32
    %c0_i32_0 = arith.constant 0 : i32
    %c0_i32_1 = arith.constant 0 : i32
    return %arg0, %c0_i32, %c0_i32_0 : i32, i32, i32
  }
}

</mosaic_0001>

<llo_original>
// kernel: tpu_custom_call.1
$region0: #{tpu_custom_call.1}
  #allocation0 [shape = 'u32[]', space=smem, size = 0x4, offset = 0x4, fixed_abs, tag = 'smem constant byte address 0x4 - core index']
  #allocation1 [shape = 'u32[144,128]{1,0:T(1,128)}', space=vmem, size = 0x12000, scoped, tag = 'internal scratch']
  #allocation2 [shape = 'f32[8,128]{1,0:T(8,128)}', space=vmem, size = 0x1000, scoped, tag = 'scratch operand']
  %s0 = inlined_call_operand.hbm [shape: f32[2,4,8,128], index: 0, kind: input, shape index: {}]
  %s1 = inlined_call_operand.hbm [shape: s32[2,1,8,128], index: 1, kind: input, shape index: {}]
  %s2 = inlined_call_operand.hbm [shape: f32[2,1,128], index: 2, kind: output, shape index: {}]
  %s3 = sld [smem:[#allocation0]]
  $region57: #{tpu_custom_call.1} parent=0
    _
  %s5 = ssub.s32 1, %s3
  %s6 = scalar_select 0, %s5, %s3
  $region1: #{tpu_custom_call.1} parent=0
    #allocation3 [shape = 'u8[32768]{0}', space=vmem, size = 0x8000, scoped, tag = 'input window, operand 0']
    #allocation4 [shape = 's32[2]{0}', space=sflag, size = 0x8, scoped, tag = 'scoped memory for tpu_custom_call.1']
    #allocation5 [shape = 's32[2]{0}', space=sflag, size = 0x8, scoped, tag = 'scoped memory for tpu_custom_call.1']
    #allocation6 [shape = 'u8[8192]{0}', space=vmem, size = 0x2000, scoped, tag = 'input window, operand 1']
    #allocation7 [shape = 's32[2]{0}', space=sflag, size = 0x8, scoped, tag = 'scoped memory for tpu_custom_call.1']
    #allocation8 [shape = 'u8[1024]{0}', space=vmem, size = 0x400, scoped, tag = 'output window, operand 0']
    %7 = vsyncpa [#allocation4], 0
    %s8 = scalar_lea.sflag [#allocation4], 1
    %9 = vsyncpa %s8, 0
    %10 = vsyncpa [#allocation7], 0
    %s11 = scalar_lea.sflag [#allocation7], 1
    %12 = vsyncpa %s11, 0
    %13 = vsyncpa [#allocation5], 0
    %s14 = scalar_lea.sflag [#allocation5], 1
    %15 = vsyncpa %s14, 0
    loop: start=0, step=1, limit=4
    $region2: #{tpu_custom_call.1} parent=1 // loop_pre_header
      _
    $region3: #{tpu_custom_call.1} parent=1 // loop_header
      %s17 = sphi 0, %s21
      %p18 = scmp.ge.s32.totalorder %s17, 4
      %s24 = sphi 0, %s36
      %s25 = sphi 0, %s32
      %s26 = sphi 0, %s24
      %s27 = sphi 0, %s25
      %s28 = sphi 0, %s26
      %s29 = sphi 0, %s27
      %s41 = sphi 0, %s43
      %s44 = sphi 0, %s41
      %s45 = sphi 0, %s44
      %s61 = sphi 0, %s45
      %s69 = sphi 0, %s71
      %s72 = sphi 0, %s69
      %s73 = sphi 0, %s72
      %s89 = sphi 0, %s73
      %s95 = sphi 0, %s97
      %s98 = sphi 0, %s95
      %s99 = sphi 0, %s98
      %s115 = sphi 0, %s99
    $region4: #{tpu_custom_call.1} parent=1 // loop_header_branch
      %20 = sbr.rel (%p18) target = $region8
    $region5: #{tpu_custom_call.1} parent=1 // loop_body
      %s22 = ssub.s32 %s17, 1
      %s23 = ssub.s32 %s17, 2
      %s30 = sadd.s32 1, %s25
      %p31 = scmp.ge.s32.totalorder %s30, 1
      %s32 = scalar_select %p31, 0, %s30
      %s33 = sadd.s32 1, %s24
      %s34 = scalar_select %p31, %s33, %s24
      %p35 = scmp.ge.s32.totalorder %s34, 2
      %s36 = scalar_select %p35, 0, %s34
      %s37 = ssub.s32 %s24, %s36
      %s38 = ssub.s32 %s25, %s32
      %s39 = sor.u32 %s37, %s38
      %p40 = scmp.eq.s32.totalorder %s39, 0
      %s42 = sadd.s32 %s41, 1
      %s43 = scalar_select %p40, %s41, %s42
      %p46 = pneg %p40
      %p47 = scmp.eq.s32.totalorder %s17, 1
      %p48 = por %p46, %p47
      %p49 = scmp.ne.s32.totalorder %s41, %s44
      %p50 = scmp.eq.s32.totalorder %s17, 0
      %p51 = por %p49, %p50
      %p52 = scmp.ne.s32.totalorder %s41, %s44
      %p53 = scmp.eq.s32.totalorder %s22, 1
      %p54 = por %p52, %p53
      %p55 = scmp.ne.s32.totalorder %s44, %s45
      %p56 = scmp.eq.s32.totalorder %s22, 0
      %p57 = por %p55, %p56
      %p58 = scmp.ne.s32.totalorder %s44, %s45
      %p59 = scmp.eq.s32.totalorder %s23, 1
      %p60 = por %p58, %p59
      %p62 = scmp.ne.s32.totalorder %s45, %s61
      %p63 = scmp.eq.s32.totalorder %s23, 0
      %p64 = por %p62, %p63
      %s65 = ssub.s32 %s24, %s36
      %s66 = ssub.s32 %s25, %s32
      %s67 = sor.u32 %s65, %s66
      %p68 = scmp.eq.s32.totalorder %s67, 0
      %s70 = sadd.s32 %s69, 1
      %s71 = scalar_select %p68, %s69, %s70
      %p74 = pneg %p68
      %p75 = scmp.eq.s32.totalorder %s17, 1
      %p76 = por %p74, %p75
      %p77 = scmp.ne.s32.totalorder %s69, %s72
      %p78 = scmp.eq.s32.totalorder %s17, 0
      %p79 = por %p77, %p78
      %p80 = scmp.ne.s32.totalorder %s69, %s72
      %p81 = scmp.eq.s32.totalorder %s22, 1
      %p82 = por %p80, %p81
      %p83 = scmp.ne.s32.totalorder %s72, %s73
      %p84 = scmp.eq.s32.totalorder %s22, 0
      %p85 = por %p83, %p84
      %p86 = scmp.ne.s32.totalorder %s72, %s73
      %p87 = scmp.eq.s32.totalorder %s23, 1
      %p88 = por %p86, %p87
      %p90 = scmp.ne.s32.totalorder %s73, %s89
      %p91 = scmp.eq.s32.totalorder %s23, 0
      %p92 = por %p90, %p91
      %s93 = ssub.s32 %s24, %s36
      %p94 = scmp.eq.s32.totalorder %s93, 0
      %s96 = sadd.s32 %s95, 1
      %s97 = scalar_select %p94, %s95, %s96
      %p100 = pneg %p94
      %p101 = scmp.eq.s32.totalorder %s17, 1
      %p102 = por %p100, %p101
      %p103 = scmp.ne.s32.totalorder %s95, %s98
      %p104 = scmp.eq.s32.totalorder %s17, 0
      %p105 = por %p103, %p104
      %p106 = scmp.ne.s32.totalorder %s95, %s98
      %p107 = scmp.eq.s32.totalorder %s22, 1
      %p108 = por %p106, %p107
      %p109 = scmp.ne.s32.totalorder %s98, %s99
      %p110 = scmp.eq.s32.totalorder %s22, 0
      %p111 = por %p109, %p110
      %p112 = scmp.ne.s32.totalorder %s98, %s99
      %p113 = scmp.eq.s32.totalorder %s23, 1
      %p114 = por %p112, %p113
      %p116 = scmp.ne.s32.totalorder %s99, %s115
      %p117 = scmp.eq.s32.totalorder %s23, 0
      %p118 = por %p116, %p117
      %p119 = scmp.le.s32.totalorder 1, %s17
      %p120 = scmp.lt.s32.totalorder %s17, 3
      %p121 = pnand %p119, %p120
      %p122 = pneg %p121
      // Predicated region
      $region9: #{tpu_custom_call.1} parent=5 // pred_check
        _
      $region10: #{tpu_custom_call.1} parent=5 // pred_check_branch
        %124 = sbr.rel (%p121) target = $region12
      $region11: #{tpu_custom_call.1} parent=5 // pred_region
        %s125 = ssub.s32 %s17, 1
      $region12: #{tpu_custom_call.1} parent=5 // pred_fallthru
        _
      %p126 = scmp.lt.s32.totalorder %s17, 2
      // Predicated region
      $region13: #{tpu_custom_call.1} parent=5 // pred_check
        %p127 = pneg %p126
      $region14: #{tpu_custom_call.1} parent=5 // pred_check_branch
        %129 = sbr.rel (%p127) target = $region16
      $region15: #{tpu_custom_call.1} parent=5 // pred_region
        // Predicated region
        $region17: #{tpu_custom_call.1} parent=15 // pred_check
          %p130 = pneg %p51
        $region18: #{tpu_custom_call.1} parent=15 // pred_check_branch
          %132 = sbr.rel (%p130) target = $region20
        $region19: #{tpu_custom_call.1} parent=15 // pred_region
          %s133 = sand.u32 %s41, 1
          %s134 = scalar_lea.sflag [#allocation4], %s133
          %s135 = sand.u32 %s41, 1
          %s136 = smul.addr %s135, 32
          %s137 = scalar_lea.vmem [#allocation3], %s136
          %s139 = ssub.s32 512, 512
          %140 = vsyncadd %s134, %s139
          %s141 = smul.addr %s24, 4
          %s142 = sadd.s32 %s25, %s141
          %s143 = smul.addr %s142, 128
          %s144 = scalar_lea.hbm %s0, %s143
          %s145 = sshll.u32 %s137, 4
          %s146 = int_to_ptr.vmem [resolvable:$true] %s145
          %151 = dma.hbm_to_vmem [thread:$0]  %s144, 512, %s146, %s134, 128, 128, 8
        $region20: #{tpu_custom_call.1} parent=15 // pred_fallthru
          _
        // Predicated region
        $region21: #{tpu_custom_call.1} parent=15 // pred_check
          %p152 = pneg %p79
        $region22: #{tpu_custom_call.1} parent=15 // pred_check_branch
          %154 = sbr.rel (%p152) target = $region24
        $region23: #{tpu_custom_call.1} parent=15 // pred_region
          %s155 = sand.u32 %s69, 1
          %s156 = scalar_lea.sflag [#allocation7], %s155
          %s157 = sand.u32 %s69, 1
          %s158 = smul.addr %s157, 8
          %s159 = scalar_lea.vmem [#allocation6], %s158
          %s161 = ssub.s32 128, 128
          %162 = vsyncadd %s156, %s161
          %s163 = sadd.s32 %s25, %s24
          %s164 = smul.addr %s163, 128
          %s165 = scalar_lea.hbm %s1, %s164
          %s167 = sshll.u32 %s159, 4
          %s168 = int_to_ptr.vmem [resolvable:$true] %s167
          %170 = dma.hbm_to_vmem [thread:$0]  %s165, 128, %s168, %s156
        $region24: #{tpu_custom_call.1} parent=15 // pred_fallthru
          _
      $region16: #{tpu_custom_call.1} parent=5 // pred_fallthru
        _
      %p171 = scmp.le.s32.totalorder 1, %s17
      %p172 = scmp.lt.s32.totalorder %s17, 3
      %p173 = pnand %p171, %p172
      %p174 = pneg %p173
      // Predicated region
      $region25: #{tpu_custom_call.1} parent=5 // pred_check
        _
      $region26: #{tpu_custom_call.1} parent=5 // pred_check_branch
        %176 = sbr.rel (%p173) target = $region28
      $region27: #{tpu_custom_call.1} parent=5 // pred_region
        %s177 = ssub.s32 %s17, 1
        %s178 = sand.u32 %s44, 1
        %s179 = scalar_lea.sflag [#allocation4], %s178
        %s180 = sand.u32 %s44, 1
        %s181 = smul.addr %s180, 32
        %s182 = scalar_lea.vmem [#allocation3], %s181
        // Predicated region
        $region29: #{tpu_custom_call.1} parent=27 // pred_check
          %p183 = pneg %p57
        $region30: #{tpu_custom_call.1} parent=27 // pred_check_branch
          %185 = sbr.rel (%p183) target = $region32
        $region31: #{tpu_custom_call.1} parent=27 // pred_region
          %186 = dma.done %s179, 512
        $region32: #{tpu_custom_call.1} parent=27 // pred_fallthru
          _
        %s187 = sand.u32 %s72, 1
        %s188 = scalar_lea.sflag [#allocation7], %s187
        %s189 = sand.u32 %s72, 1
        %s190 = smul.addr %s189, 8
        %s191 = scalar_lea.vmem [#allocation6], %s190
        // Predicated region
        $region33: #{tpu_custom_call.1} parent=27 // pred_check
          %p192 = pneg %p85
        $region34: #{tpu_custom_call.1} parent=27 // pred_check_branch
          %194 = sbr.rel (%p192) target = $region36
        $region35: #{tpu_custom_call.1} parent=27 // pred_region
          %195 = dma.done %s188, 128
        $region36: #{tpu_custom_call.1} parent=27 // pred_fallthru
          _
        %s196 = sand.u32 %s44, 1
        %s197 = scalar_lea.sflag [#allocation4], %s196
        %s198 = sand.u32 %s44, 1
        %s199 = smul.addr %s198, 32
        %s200 = scalar_lea.vmem [#allocation3], %s199
        %p201 = pneg %p57
        %p202 = pneg %p54
        %s203 = sand.u32 %s72, 1
        %s204 = scalar_lea.sflag [#allocation7], %s203
        %s205 = sand.u32 %s72, 1
        %s206 = smul.addr %s205, 8
        %s207 = scalar_lea.vmem [#allocation6], %s206
        %p208 = pneg %p85
        %p209 = pneg %p82
        %p210 = pneg %p111
        %p211 = pneg %p108
        %s212 = sand.u32 %s98, 1
        %s213 = scalar_lea.sflag [#allocation5], %s212
        %s214 = sand.u32 %s98, 1
        %s215 = scalar_lea.vmem [#allocation8], %s214
        %p216 = scmp.eq.s32.totalorder %s27, 0
        // Predicated region
        $region37: #{tpu_custom_call.1} parent=27 // pred_check
          %p217 = pneg %p216
        $region38: #{tpu_custom_call.1} parent=27 // pred_check_branch
          %219 = sbr.rel (%p217) target = $region40
        $region39: #{tpu_custom_call.1} parent=27 // pred_region
          %220 = vst [vmem:[#allocation2] sm:$0xff] 0.0
        $region40: #{tpu_custom_call.1} parent=27 // pred_fallthru
          _
        %v221 = vld [vmem:[#allocation2] sm:$0xff]
        %v222 = vld [vmem:[%s191] sm:$0xff]
        %v223 = vld [vmem:[%s182] sm:$0xff]
        %s224 = sadd.s32 0, 8
        %s225 = scalar_lea.vmem %s182, %s224 [#allocation3]
        %v226 = vld [vmem:[%s225] sm:$0xff]
        %v227 = vmax.f32 %v223, %v226
        %s228 = sadd.s32 0, 16
        %s229 = scalar_lea.vmem %s182, %s228 [#allocation3]
        %v230 = vld [vmem:[%s229] sm:$0xff]
        %v231 = vmax.f32 %v227, %v230
        %s232 = sadd.s32 0, 24
        %s233 = scalar_lea.vmem %s182, %s232 [#allocation3]
        %v234 = vld [vmem:[%s233] sm:$0xff]
        %v235 = vmax.f32 %v231, %v234
        %v236 = vsub.f32 %v223, %v235
        %v237 = vmul.f32 %v236, 1.442695
        %v238 = vpow.pop %v237
        %v239 = vadd.f32 %v238, 0.0
        %vm240 = vcmp.eq.s32.totalorder %v222, 0
        %v241 = vsel %vm240, %v236, 0.0
        %v242 = vsel %vm240, %v238, 0.0
        %v243 = vsel %vm240, 0.25, 0.0
        %v244 = vsub.f32 %v226, %v235
        %v245 = vmul.f32 %v244, 1.442695
        %v246 = vpow.pop %v245
        %v247 = vadd.f32 %v239, %v246
        %vm248 = vcmp.eq.s32.totalorder %v222, 1
        %v249 = vsel %vm248, %v244, %v241
        %v250 = vsel %vm248, %v246, %v242
        %v251 = vsel %vm248, 0.75, %v243
        %v252 = vsub.f32 %v230, %v235
        %v253 = vmul.f32 %v252, 1.442695
        %v254 = vpow.pop %v253
        %v255 = vadd.f32 %v247, %v254
        %vm256 = vcmp.eq.s32.totalorder %v222, 2
        %v257 = vsel %vm256, %v252, %v249
        %v258 = vsel %vm256, %v254, %v250
        %v259 = vsel %vm256, 0.5, %v251
        %v260 = vsub.f32 %v234, %v235
        %v261 = vmul.f32 %v260, 1.442695
        %v262 = vpow.pop %v261
        %v263 = vadd.f32 %v255, %v262
        %vm264 = vcmp.eq.s32.totalorder %v222, 3
        %v265 = vsel %vm264, %v260, %v257
        %v266 = vsel %vm264, %v262, %v258
        %v267 = vsel %vm264, 0.5, %v259
        %v268 = vlog2.pop %v263
        %v269 = vmul.f32 %v268, 0.6931472
        %v270 = vsub.f32 %v265, %v269
        %v271 = vrcp.pop %v263
        %v272 = vmul.f32 %v263, %v271
        %v273 = vsub.f32 2.0, %v272
        %v274 = vmul.f32 %v271, %v273
        %v275 = vmul.f32 %v266, %v274
        %v276 = vmul.f32 %v270, %v267
        %v277 = vsub.f32 1.0, %v275
        %v278 = vmax.f32 %v277, 0.0
        %v279 = vmul.f32 %v278, %v278
        %v280 = vmul.f32 %v279, %v276
        %v281 = vsub.f32 0.0, %v280
        %vm282 = vcmp.ge.s32.totalorder %v222, 0
        %v283 = vsel %vm282, %v281, 0.0
        %v284 = vadd.f32 %v283, 0.0
        %v285 = vadd.f32 %v221, %v284
        %286 = vst [vmem:[#allocation2] sm:$0xff] %v285
        // Predicated region
        $region41: #{tpu_custom_call.1} parent=27 // pred_check
          %p287 = pneg %p216
        $region42: #{tpu_custom_call.1} parent=27 // pred_check_branch
          %289 = sbr.rel (%p287) target = $region44
        $region43: #{tpu_custom_call.1} parent=27 // pred_region
          %v290 = vld [vmem:[#allocation2] sm:$0xff]
          %v291 = vrot.slane %v290, 4
          %v292 = vadd.f32 %v290, %v291
          %v293 = vrot.slane %v292, 2
          %v294 = vadd.f32 %v292, %v293
          %v295 = vrot.slane %v294, 1
          %v296 = vadd.f32 %v294, %v295
          %297 = vst [vmem:[%s215] sm:$0x1] %v296
        $region44: #{tpu_custom_call.1} parent=27 // pred_fallthru
          _
        %s298 = sand.u32 %s98, 1
        %s299 = scalar_lea.sflag [#allocation5], %s298
        %s300 = sand.u32 %s98, 1
        %s301 = scalar_lea.vmem [#allocation8], %s300
        // Predicated region
        $region45: #{tpu_custom_call.1} parent=27 // pred_check
          %p302 = pneg %p108
        $region46: #{tpu_custom_call.1} parent=27 // pred_check_branch
          %304 = sbr.rel (%p302) target = $region48
        $region47: #{tpu_custom_call.1} parent=27 // pred_region
          %s306 = ssub.s32 16, 16
          %307 = vsyncadd %s299, %s306
          %s308 = smul.addr %s26, 16
          %s309 = scalar_lea.hbm %s2, %s308
          %s311 = sshll.u32 %s301, 4
          %s312 = int_to_ptr.vmem [resolvable:$true] %s311
          %314 = dma.vmem_to_hbm [thread:$0]  %s312, 16, %s309, %s299
        $region48: #{tpu_custom_call.1} parent=27 // pred_fallthru
          _
      $region28: #{tpu_custom_call.1} parent=5 // pred_fallthru
        _
      %p315 = scmp.le.s32.totalorder 2, %s17
      // Predicated region
      $region49: #{tpu_custom_call.1} parent=5 // pred_check
        %p316 = pneg %p315
      $region50: #{tpu_custom_call.1} parent=5 // pred_check_branch
        %318 = sbr.rel (%p316) target = $region52
      $region51: #{tpu_custom_call.1} parent=5 // pred_region
        %s319 = ssub.s32 %s17, 2
        // Predicated region
        $region53: #{tpu_custom_call.1} parent=51 // pred_check
          %p320 = pneg %p114
        $region54: #{tpu_custom_call.1} parent=51 // pred_check_branch
          %322 = sbr.rel (%p320) target = $region56
        $region55: #{tpu_custom_call.1} parent=51 // pred_region
          %s323 = sand.u32 %s99, 1
          %s324 = scalar_lea.sflag [#allocation5], %s323
          %s325 = sand.u32 %s99, 1
          %s326 = scalar_lea.vmem [#allocation8], %s325
          %327 = dma.done %s324, 16
        $region56: #{tpu_custom_call.1} parent=51 // pred_fallthru
          _
      $region52: #{tpu_custom_call.1} parent=5 // pred_fallthru
        _
    $region6: #{tpu_custom_call.1} parent=1 // loop_footer
      %s21 = sadd.s32 1, %s17
    $region7: #{tpu_custom_call.1} parent=1 // loop_footer_branch
      %16 = sbr.rel target = $region3
    $region8: #{tpu_custom_call.1} parent=1 // loop_exit
      _
    %328 = vsyncpa [#allocation4], 1
    %s329 = scalar_lea.sflag [#allocation4], 1
    %330 = vsyncpa %s329, 1
    %331 = vsyncpa [#allocation7], 1
    %s332 = scalar_lea.sflag [#allocation7], 1
    %333 = vsyncpa %s332, 1
    %334 = vsyncpa [#allocation5], 1
    %s335 = scalar_lea.sflag [#allocation5], 1
    %336 = vsyncpa %s335, 1

</llo_original>
